<compile_context>
chip_gen: v7x
topology: tpu7x:2x2x1
jax: 0.10.0
libtpu: 0.0.40
codegen_flags: <defaults>
</compile_context>

<pallas_src>
import functools

import jax
import jax.numpy as jnp
from jax.experimental import pallas as pl
from jax.experimental.pallas import tpu as pltpu

EPS = 1e-8
_LANE = 128
_SUBLANE = 8


def _round_up(x, m):
    return ((x + m - 1) // m) * m


def _cdiv(a, b):
    return (a + b - 1) // b


def _encoder_kernel(x_ref, uv_ref, w_ref, norm_ref, *, n, n_pad):
    # x_ref:    [tm, L]        tile of flattened mixture (rows >= M are zero)
    # uv_ref:   [L, 2*N_pad]   fused [U^T | V^T] weights (N zero-padded to 128)
    # w_ref:    [tm, N]        output mixture_w tile
    # norm_ref: [tm, 1]        output L2-norm tile
    x = x_ref[...].astype(jnp.float32)

    # Row-wise L2 norm over L.  Exact reciprocal: only tm per-row scalars, so
    # the Newton-refinement cost is negligible and 1e-5 accuracy is preserved.
    norm = jnp.sqrt(jnp.sum(x * x, axis=-1, keepdims=True))
    inv = pl.reciprocal(norm + EPS, approx=False)
    xn = x * inv

    # One fused, lane-dense MXU matmul: [tm, L] @ [L, 2*N_pad].
    uv = uv_ref[...]
    res = jnp.dot(xn.astype(uv.dtype), uv, preferred_element_type=jnp.float32)

    conv = jnp.maximum(res[:, :n], 0.0)                          # ReLU (U half)
    # sigmoid(x) == 0.5*tanh(0.5*x) + 0.5  -> single EUP pass (V half starts at
    # the lane-aligned offset n_pad).
    gate = 0.5 * jnp.tanh(0.5 * res[:, n_pad:n_pad + n]) + 0.5

    w_ref[...] = (conv * gate).astype(w_ref.dtype)
    norm_ref[...] = norm.astype(norm_ref.dtype)


def encoder_forward(mixture, weight_u, weight_v, *, tm=1024,
                    use_bf16_matmul=False,
                    vmem_budget_bytes=24 * 1024 * 1024,
                    min_grid_steps=2):
    """mixture: [B, K, L]; weight_u / weight_v: [N, L] (Conv1d weights with the
    kernel dim squeezed). Returns (mixture_w [B, K, N], norm_coef [B, K, 1]).

    use_bf16_matmul works on all generations (v5e/v6e/v7x MXUs natively take
    bf16); only the matmul operands are bf16, norm / ReLU / sigmoid stay f32.
    """
    B, K, L = mixture.shape
    N = weight_u.shape[0]
    M = B * K

    N_pad = _round_up(N, _LANE)
    mat_dtype = jnp.bfloat16 if use_bf16_matmul else jnp.float32

    # Fused weight slab [L, 2*N_pad] = [ U^T | V^T ] (only N padded, L untouched).
    def _pad_wt(w):
        return jnp.pad(jnp.transpose(w), ((0, 0), (0, N_pad - N)))

    uv = jnp.concatenate([_pad_wt(weight_u), _pad_wt(weight_v)],
                         axis=1).astype(mat_dtype)

    in_bytes = jnp.dtype(mixture.dtype).itemsize
    out_bytes = jnp.dtype(mixture.dtype).itemsize
    mm_bytes = jnp.dtype(mat_dtype).itemsize
    weight_bytes = L * 2 * N_pad * mm_bytes

    def _vmem(t):
        # Double-buffered pipelined blocks (x, w, norm) + 2x weight buffers
        # (fetched once, but BlockSpec still allocates two) + the in-kernel f32
        # intermediates (xn, matmul result, conv*gate temp) that were
        # previously un-counted.
        pipelined = 2 * t * (L * in_bytes + N * out_bytes + out_bytes)
        inter = t * (L * 4 + 2 * N_pad * 4 + N_pad * 4)
        if mm_bytes == 2:
            inter += t * L * 2       # bf16 xn operand copy
        return pipelined + 2 * weight_bytes + inter

    # Rows padded only to a sublane multiple (waste <= 7 rows), never to tm.
    M_pad = _round_up(M, _SUBLANE)

    # Cap the row tile so the "parallel" grid has >= min_grid_steps steps
    # (keeps both v7x TensorCores busy), then shrink to fit the VMEM budget.
    tm_cap = max(_SUBLANE, _round_up(_cdiv(M_pad, min_grid_steps), _SUBLANE))
    tm_eff = max(_SUBLANE, (min(tm, M_pad, tm_cap) // _SUBLANE) * _SUBLANE)
    while tm_eff > _SUBLANE and _vmem(tm_eff) > vmem_budget_bytes:
        tm_eff = max(_SUBLANE, _round_up(tm_eff // 2, _SUBLANE))

    grid = (_cdiv(M_pad, tm_eff),)   # ragged last block: OOB writes are masked

    x2d = mixture.reshape(M, L)
    if M_pad != M:
        x2d = jnp.pad(x2d, ((0, M_pad - M), (0, 0)))

    cost = pl.CostEstimate(
        flops=2 * M_pad * L * 2 * N_pad,
        transcendentals=M_pad * (N + 1),
        bytes_accessed=(in_bytes * M_pad * L + mm_bytes * L * 2 * N_pad
                        + out_bytes * M_pad * (N + 1)),
    )

    vmem_limit = int(min(48 << 20, max(24 << 20, _vmem(tm_eff) + (8 << 20))))

    kernel = functools.partial(_encoder_kernel, n=N, n_pad=N_pad)

    w2d, norm2d = pl.pallas_call(
        kernel,
        out_shape=(
            jax.ShapeDtypeStruct((M_pad, N), mixture.dtype),
            jax.ShapeDtypeStruct((M_pad, 1), mixture.dtype),
        ),
        grid_spec=pltpu.PrefetchScalarGridSpec(
            num_scalar_prefetch=0,
            grid=grid,
            in_specs=[
                pl.BlockSpec((tm_eff, L), lambda i: (i, 0)),
                pl.BlockSpec((L, 2 * N_pad), lambda i: (0, 0)),
            ],
            out_specs=[
                pl.BlockSpec((tm_eff, N), lambda i: (i, 0)),
                pl.BlockSpec((tm_eff, 1), lambda i: (i, 0)),
            ],
        ),
        compiler_params=pltpu.CompilerParams(
            dimension_semantics=("parallel",),
            vmem_limit_bytes=vmem_limit,
        ),
        cost_estimate=cost,
    )(x2d, uv)

    # With M a multiple of 8 (and always for the N axis) these are free views.
    mixture_w = w2d[:M].reshape(B, K, N)
    norm_coef = norm2d[:M].reshape(B, K, 1)
    return mixture_w, norm_coef


def encoder_reference(mixture, weight_u, weight_v):
    """Pure-JAX reference matching the PyTorch forward exactly."""
    norm_coef = jnp.linalg.norm(mixture, axis=2, keepdims=True)
    normed = mixture / (norm_coef + EPS)
    conv = jax.nn.relu(jnp.einsum("bkl,nl->bkn", normed, weight_u))
    gate = jax.nn.sigmoid(jnp.einsum("bkl,nl->bkn", normed, weight_v))
    return conv * gate, norm_coef


if __name__ == "__main__":
    # Small shapes consistent with the module: B batches, K segments,
    # L samples/segment, N basis signals.
    B, K, L, N = 2, 8, 32, 64

    key = jax.random.PRNGKey(0)
    k_x, k_u, k_v = jax.random.split(key, 3)

    mixture = jax.random.normal(k_x, (B, K, L), dtype=jnp.float32)
    weight_u = jax.random.normal(k_u, (N, L), dtype=jnp.float32) * 0.1
    weight_v = jax.random.normal(k_v, (N, L), dtype=jnp.float32) * 0.1

    # Strict f32 path (matches the reference to tight tolerance).
    mixture_w, norm_coef = jax.jit(encoder_forward)(mixture, weight_u, weight_v)
    jax.block_until_ready((mixture_w, norm_coef))

    ref_w, ref_norm = encoder_reference(mixture, weight_u, weight_v)
    assert mixture_w.shape == (B, K, N)
    assert norm_coef.shape == (B, K, 1)
    assert jnp.allclose(mixture_w, ref_w, atol=1e-5, rtol=1e-5)
    assert jnp.allclose(norm_coef, ref_norm, atol=1e-5, rtol=1e-5)

    # bf16-MXU fast path (any generation): only the matmul operands are bf16,
    # norm / ReLU / sigmoid stay f32 -> looser tolerance on mixture_w only.
    fast = jax.jit(functools.partial(encoder_forward, use_bf16_matmul=True))
    w_bf16, n_bf16 = fast(mixture, weight_u, weight_v)
    jax.block_until_ready((w_bf16, n_bf16))
    assert jnp.allclose(w_bf16, ref_w, atol=3e-2, rtol=3e-2)
    assert jnp.allclose(n_bf16, ref_norm, atol=1e-5, rtol=1e-5)

    print("KERNEL_OK")
</pallas_src>

<mosaic_0001>
module attributes {stable_mosaic.version = 11 : i64} {
  func.func @_encoder_kernel(%arg0: i32, %arg1: memref<8x32xf32, #tpu.memory_space<vmem>>, %arg2: memref<32x256xf32, #tpu.memory_space<vmem>>, %arg3: memref<8x64xf32, #tpu.memory_space<vmem>>, %arg4: memref<8x1xf32, #tpu.memory_space<vmem>>) attributes {dimension_semantics = [#tpu.dimension_semantics<parallel>], iteration_bounds = array<i64: 2>, scalar_prefetch = 0 : i64, scratch_operands = 0 : i64, tpu.core_type = #tpu.core_type<tc>, window_params = [{transform_indices = @transform_0, window_bounds = array<i64: 8, 32>}, {pipeline_mode = #tpu.pipeline_mode<synchronous>, transform_indices = @transform_1, window_bounds = array<i64: 32, 256>}, {transform_indices = @transform_2, window_bounds = array<i64: 8, 64>}, {transform_indices = @transform_3, window_bounds = array<i64: 8, 1>}]} {
    %c0 = arith.constant 0 : index
    %c0_0 = arith.constant 0 : index
    %0 = vector.load %arg1[%c0, %c0_0] : memref<8x32xf32, #tpu.memory_space<vmem>>, vector<8x32xf32>
    %1 = arith.mulf %0, %0 : vector<8x32xf32>
    %cst = arith.constant dense<0.000000e+00> : vector<8xf32>
    %2 = vector.multi_reduction <add>, %1, %cst [1] : vector<8x32xf32> to vector<8xf32>
    %3 = vector.shape_cast %2 : vector<8xf32> to vector<8x1xf32>
    %4 = math.sqrt %3 : vector<8x1xf32>
    %cst_1 = arith.constant 9.99999993E-9 : f32
    %5 = vector.broadcast %cst_1 : f32 to vector<8x1xf32>
    %6 = arith.addf %4, %5 : vector<8x1xf32>
    %7 = tpu.reciprocal %6 : vector<8x1xf32> -> vector<8x1xf32>
    %8 = vector.broadcast %7 : vector<8x1xf32> to vector<8x32xf32>
    %9 = arith.mulf %0, %8 : vector<8x32xf32>
    %c0_2 = arith.constant 0 : index
    %c0_3 = arith.constant 0 : index
    %10 = vector.load %arg2[%c0_2, %c0_3] : memref<32x256xf32, #tpu.memory_space<vmem>>, vector<32x256xf32>
    %cst_4 = arith.constant dense<0.000000e+00> : vector<8x256xf32>
    %11 = tpu.matmul %9, %10, %cst_4 {dimension_numbers = #tpu.dot_dimension_numbers<[1], [0], [0], [1], [0, 0, 1, 1], [], []>} : vector<8x32xf32>, vector<32x256xf32>, vector<8x256xf32> -> vector<8x256xf32>
    %12 = vector.extract_strided_slice %11 {offsets = [0, 0], sizes = [8, 64], strides = [1, 1]} : vector<8x256xf32> to vector<8x64xf32>
    %cst_5 = arith.constant 0.000000e+00 : f32
    %13 = vector.broadcast %cst_5 : f32 to vector<8x64xf32>
    %14 = arith.maximumf %12, %13 : vector<8x64xf32>
    %15 = vector.extract_strided_slice %11 {offsets = [0, 128], sizes = [8, 64], strides = [1, 1]} : vector<8x256xf32> to vector<8x64xf32>
    %cst_6 = arith.constant 5.000000e-01 : f32
    %16 = vector.broadcast %cst_6 : f32 to vector<8x64xf32>
    %17 = arith.mulf %16, %15 : vector<8x64xf32>
    %18 = math.tanh %17 : vector<8x64xf32>
    %cst_7 = arith.constant 5.000000e-01 : f32
    %19 = vector.broadcast %cst_7 : f32 to vector<8x64xf32>
    %20 = arith.mulf %19, %18 : vector<8x64xf32>
    %cst_8 = arith.constant 5.000000e-01 : f32
    %21 = vector.broadcast %cst_8 : f32 to vector<8x64xf32>
    %22 = arith.addf %20, %21 : vector<8x64xf32>
    %23 = arith.mulf %14, %22 : vector<8x64xf32>
    %c0_9 = arith.constant 0 : index
    %c0_10 = arith.constant 0 : index
    %24 = vector.load %arg3[%c0_9, %c0_10] : memref<8x64xf32, #tpu.memory_space<vmem>>, vector<8x64xf32>
    tpu.vector_store %arg3[%c0_9, %c0_10], %23 {strides = array<i32>} : memref<8x64xf32, #tpu.memory_space<vmem>>, vector<8x64xf32>,
    %c0_11 = arith.constant 0 : index
    %c0_12 = arith.constant 0 : index
    %25 = vector.load %arg4[%c0_11, %c0_12] : memref<8x1xf32, #tpu.memory_space<vmem>>, vector<8x1xf32>
    tpu.vector_store %arg4[%c0_11, %c0_12], %4 {strides = array<i32>} : memref<8x1xf32, #tpu.memory_space<vmem>>, vector<8x1xf32>,
    return
  }
  func.func @transform_0(%arg0: i32) -> (i32, i32) {
    %c0_i32 = arith.constant 0 : i32
    %c0_i32_0 = arith.constant 0 : i32
    return %arg0, %c0_i32 : i32, i32
  }
  func.func @transform_1(%arg0: i32) -> (i32, i32) {
    %c0_i32 = arith.constant 0 : i32
    %c0_i32_0 = arith.constant 0 : i32
    %c0_i32_1 = arith.constant 0 : i32
    return %c0_i32, %c0_i32_0 : i32, i32
  }
  func.func @transform_2(%arg0: i32) -> (i32, i32) {
    %c0_i32 = arith.constant 0 : i32
    %c0_i32_0 = arith.constant 0 : i32
    return %arg0, %c0_i32 : i32, i32
  }
  func.func @transform_3(%arg0: i32) -> (i32, i32) {
    %c0_i32 = arith.constant 0 : i32
    %c0_i32_0 = arith.constant 0 : i32
    return %arg0, %c0_i32 : i32, i32
  }
}

</mosaic_0001>

<llo_original>
// kernel: encoder_forward.1
$region0: #{encoder_forward.1}
  #allocation0 [shape = 'u32[]', space=smem, size = 0x4, offset = 0x4, fixed_abs, tag = 'smem constant byte address 0x4 - core index']
  #allocation1 [shape = 'u32[144,128]{1,0:T(1,128)}', space=vmem, size = 0x12000, scoped, tag = 'internal scratch']
  %s0 = inlined_call_operand.vmem [shape: f32[16,32], index: 0, kind: input, shape index: {}]
  %s1 = inlined_call_operand.vmem [shape: f32[32,256], index: 1, kind: input, shape index: {}]
  %s2 = inlined_call_operand.hbm [shape: f32[16,64], index: 2, kind: output, shape index: {0}]
  %s3 = inlined_call_operand.vmem [shape: f32[16,1], index: 3, kind: output, shape index: {1}]
  %4 = xla_tuple %s2, %s3
  %s5 = sld [smem:[#allocation0]]
  $region49: #{encoder_forward.1} parent=0
    _
  %s7 = ssub.s32 1, %s5
  %s8 = scalar_select 0, %s7, %s5
  $region1: #{encoder_forward.1} parent=0
    #allocation2 [shape = 'u8[8192]{0}', space=vmem, size = 0x2000, scoped, tag = 'output window, operand 0']
    #allocation3 [shape = 's32[2]{0}', space=sflag, size = 0x8, scoped, tag = 'scoped memory for encoder_forward.1']
    %9 = vsyncpa [#allocation3], 0
    %s10 = scalar_lea.sflag [#allocation3], 1
    %11 = vsyncpa %s10, 0
    loop: start=0, step=1, limit=4
    $region2: #{encoder_forward.1} parent=1 // loop_pre_header
      _
    $region3: #{encoder_forward.1} parent=1 // loop_header
      %s13 = sphi 0, %s17
      %p14 = scmp.ge.s32.totalorder %s13, 4
      %s23 = sphi 0, %s25
      %s26 = sphi 0, %s23
      %s27 = sphi 0, %s26
      %s43 = sphi 0, %s27
      %s47 = sphi 0, %s47
      %s49 = sphi 0, %s47
      %s50 = sphi 0, %s49
      %s64 = sphi 0, %s50
      %s70 = sphi 0, %s72
      %s73 = sphi 0, %s70
      %s74 = sphi 0, %s73
      %s90 = sphi 0, %s74
      %s96 = sphi 0, %s98
      %s99 = sphi 0, %s96
      %s100 = sphi 0, %s99
      %s116 = sphi 0, %s100
    $region4: #{encoder_forward.1} parent=1 // loop_header_branch
      %16 = sbr.rel (%p14) target = $region8
    $region5: #{encoder_forward.1} parent=1 // loop_body
      %s18 = ssub.s32 %s13, 1
      %s19 = ssub.s32 %s13, 2
      %s20 = sadd.s32 %s13, 1
      %s21 = ssub.s32 %s13, %s20
      %p22 = scmp.eq.s32.totalorder %s21, 0
      %s24 = sadd.s32 %s23, 1
      %s25 = scalar_select %p22, %s23, %s24
      %p28 = pneg %p22
      %p29 = scmp.eq.s32.totalorder %s13, 1
      %p30 = por %p28, %p29
      %p31 = scmp.ne.s32.totalorder %s23, %s26
      %p32 = scmp.eq.s32.totalorder %s13, 0
      %p33 = por %p31, %p32
      %p34 = scmp.ne.s32.totalorder %s23, %s26
      %p35 = scmp.eq.s32.totalorder %s18, 1
      %p36 = por %p34, %p35
      %p37 = scmp.ne.s32.totalorder %s26, %s27
      %p38 = scmp.eq.s32.totalorder %s18, 0
      %p39 = por %p37, %p38
      %p40 = scmp.ne.s32.totalorder %s26, %s27
      %p41 = scmp.eq.s32.totalorder %s19, 1
      %p42 = por %p40, %p41
      %p44 = scmp.ne.s32.totalorder %s27, %s43
      %p45 = scmp.eq.s32.totalorder %s19, 0
      %p46 = por %p44, %p45
      %s48 = sadd.s32 %s47, 1
      %p51 = scmp.eq.s32.totalorder %s13, 1
      %p52 = scmp.ne.s32.totalorder %s47, %s49
      %p53 = scmp.eq.s32.totalorder %s13, 0
      %p54 = por %p52, %p53
      %p55 = scmp.ne.s32.totalorder %s47, %s49
      %p56 = scmp.eq.s32.totalorder %s18, 1
      %p57 = por %p55, %p56
      %p58 = scmp.ne.s32.totalorder %s49, %s50
      %p59 = scmp.eq.s32.totalorder %s18, 0
      %p60 = por %p58, %p59
      %p61 = scmp.ne.s32.totalorder %s49, %s50
      %p62 = scmp.eq.s32.totalorder %s19, 1
      %p63 = por %p61, %p62
      %p65 = scmp.ne.s32.totalorder %s50, %s64
      %p66 = scmp.eq.s32.totalorder %s19, 0
      %p67 = por %p65, %p66
      %s68 = ssub.s32 %s13, %s20
      %p69 = scmp.eq.s32.totalorder %s68, 0
      %s71 = sadd.s32 %s70, 1
      %s72 = scalar_select %p69, %s70, %s71
      %p75 = pneg %p69
      %p76 = scmp.eq.s32.totalorder %s13, 1
      %p77 = por %p75, %p76
      %p78 = scmp.ne.s32.totalorder %s70, %s73
      %p79 = scmp.eq.s32.totalorder %s13, 0
      %p80 = por %p78, %p79
      %p81 = scmp.ne.s32.totalorder %s70, %s73
      %p82 = scmp.eq.s32.totalorder %s18, 1
      %p83 = por %p81, %p82
      %p84 = scmp.ne.s32.totalorder %s73, %s74
      %p85 = scmp.eq.s32.totalorder %s18, 0
      %p86 = por %p84, %p85
      %p87 = scmp.ne.s32.totalorder %s73, %s74
      %p88 = scmp.eq.s32.totalorder %s19, 1
      %p89 = por %p87, %p88
      %p91 = scmp.ne.s32.totalorder %s74, %s90
      %p92 = scmp.eq.s32.totalorder %s19, 0
      %p93 = por %p91, %p92
      %s94 = ssub.s32 %s13, %s20
      %p95 = scmp.eq.s32.totalorder %s94, 0
      %s97 = sadd.s32 %s96, 1
      %s98 = scalar_select %p95, %s96, %s97
      %p101 = pneg %p95
      %p102 = scmp.eq.s32.totalorder %s13, 1
      %p103 = por %p101, %p102
      %p104 = scmp.ne.s32.totalorder %s96, %s99
      %p105 = scmp.eq.s32.totalorder %s13, 0
      %p106 = por %p104, %p105
      %p107 = scmp.ne.s32.totalorder %s96, %s99
      %p108 = scmp.eq.s32.totalorder %s18, 1
      %p109 = por %p107, %p108
      %p110 = scmp.ne.s32.totalorder %s99, %s100
      %p111 = scmp.eq.s32.totalorder %s18, 0
      %p112 = por %p110, %p111
      %p113 = scmp.ne.s32.totalorder %s99, %s100
      %p114 = scmp.eq.s32.totalorder %s19, 1
      %p115 = por %p113, %p114
      %p117 = scmp.ne.s32.totalorder %s100, %s116
      %p118 = scmp.eq.s32.totalorder %s19, 0
      %p119 = por %p117, %p118
      %p120 = scmp.le.s32.totalorder 1, %s13
      %p121 = scmp.lt.s32.totalorder %s13, 3
      %p122 = pnand %p120, %p121
      %p123 = pneg %p122
      // Predicated region
      $region9: #{encoder_forward.1} parent=5 // pred_check
        _
      $region10: #{encoder_forward.1} parent=5 // pred_check_branch
        %125 = sbr.rel (%p122) target = $region12
      $region11: #{encoder_forward.1} parent=5 // pred_region
        %s126 = ssub.s32 %s13, 1
        // Predicated region
        $region13: #{encoder_forward.1} parent=11 // pred_check
          %p127 = pneg %p60
        $region14: #{encoder_forward.1} parent=11 // pred_check_branch
          %129 = sbr.rel (%p127) target = $region16
        $region15: #{encoder_forward.1} parent=11 // pred_region
          _
        $region16: #{encoder_forward.1} parent=11 // pred_fallthru
          _
      $region12: #{encoder_forward.1} parent=5 // pred_fallthru
        _
      %p130 = scmp.lt.s32.totalorder %s13, 2
      // Predicated region
      $region17: #{encoder_forward.1} parent=5 // pred_check
        %p131 = pneg %p130
      $region18: #{encoder_forward.1} parent=5 // pred_check_branch
        %133 = sbr.rel (%p131) target = $region20
      $region19: #{encoder_forward.1} parent=5 // pred_region
        // Predicated region
        $region21: #{encoder_forward.1} parent=19 // pred_check
          %p134 = pneg %p33
        $region22: #{encoder_forward.1} parent=19 // pred_check_branch
          %136 = sbr.rel (%p134) target = $region24
        $region23: #{encoder_forward.1} parent=19 // pred_region
          %p137 = scmp.lt.s32.totalorder %s13, 1
          %s138 = scalar_select %p137, %s13, 1
          %s139 = smul.addr %s138, 8
          %s140 = scalar_lea.vmem %s0, %s139
        $region24: #{encoder_forward.1} parent=19 // pred_fallthru
          _
      $region20: #{encoder_forward.1} parent=5 // pred_fallthru
        _
      %p141 = scmp.le.s32.totalorder 1, %s13
      %p142 = scmp.lt.s32.totalorder %s13, 3
      %p143 = pnand %p141, %p142
      %p144 = pneg %p143
      // Predicated region
      $region25: #{encoder_forward.1} parent=5 // pred_check
        _
      $region26: #{encoder_forward.1} parent=5 // pred_check_branch
        %146 = sbr.rel (%p143) target = $region28
      $region27: #{encoder_forward.1} parent=5 // pred_region
        %s147 = ssub.s32 %s13, 1
        %p148 = scmp.lt.s32.totalorder %s18, 1
        %s149 = scalar_select %p148, %s18, 1
        %s150 = smul.addr %s149, 8
        %s151 = scalar_lea.vmem %s0, %s150
        %p152 = pneg %p39
        %p153 = pneg %p36
        %p154 = pneg %p60
        %p155 = pneg %p57
        %p156 = pneg %p86
        %p157 = pneg %p83
        %s158 = sand.u32 %s73, 1
        %s159 = scalar_lea.sflag [#allocation3], %s158
        %s160 = sand.u32 %s73, 1
        %s161 = smul.addr %s160, 8
        %s162 = scalar_lea.vmem [#allocation2], %s161
        %p163 = pneg %p112
        %p164 = pneg %p109
        %p165 = scmp.lt.s32.totalorder %s18, 1
        %s166 = scalar_select %p165, %s18, 1
        %s167 = smul.addr %s166, 8
        %s168 = scalar_lea.vmem %s3, %s167
        %p169 = scmp.lt.s32.totalorder %s18, 1
        %s170 = scalar_select %p169, %s18, 1
        %s171 = smul.addr %s170, 8
        %s172 = scalar_lea.vmem %s0, %s171
        %p173 = scmp.lt.s32.totalorder %s18, 1
        %s174 = scalar_select %p173, %s18, 1
        %s175 = smul.addr %s174, 8
        %s176 = scalar_lea.vmem %s3, %s175
        %v177 = vld [vmem:[%s172] sm:$0xff]
        %v178 = vmul.f32 %v177, %v177
        %vm179 = vcmask 261120
        %v180 = vsel %vm179, %v178, 0.0
        %181 = vadd.xlane.f32.xlu0 %v180
        %v182 = vpop.xlane.xlu0 %181
        %v183 = vrsqrt.pop %v182
        %v184 = vmul.f32 %v182, %v183
        %vm185 = vcmp.eq.f32.partialorder %v182, inf
        %v186 = vsel %vm185, %v182, %v184
        %vm187 = vcmp.eq.f32.partialorder %v182, 0.0
        %v188 = vand.u32 %v182, 2147483648
        %v189 = vsel %vm187, %v188, %v186
        %v190 = vadd.f32 %v189, 1e-08
        %v191 = vrcp.pop %v190
        %v192 = vmul.f32 %v177, %v191
        %v193 = vld [vmem:[%s1] sm:$0xff]
        %v194 = vld [vmem:[%s1 + $0x8] sm:$0xff]
        %v195 = vld [vmem:[%s1 + $0x10] sm:$0xff]
        %v196 = vld [vmem:[%s1 + $0x18] sm:$0xff]
        %v197 = vld [vmem:[%s1 + $0x20] sm:$0xff]
        %v198 = vld [vmem:[%s1 + $0x28] sm:$0xff]
        %v199 = vld [vmem:[%s1 + $0x30] sm:$0xff]
        %v200 = vld [vmem:[%s1 + $0x38] sm:$0xff]
        %v202 = vsel %vm179, %v192, 0
        %204 = vmatprep.subr.mxu0 %v194
        %205 = vmatpush1.msra.mxu0 %v193
        %206 = vmatprep.subr.mxu0 %v196
        %207 = vmatpush1.msra.mxu0 %v195
        %208 = vmatprep.subr.mxu0 %v198
        %209 = vmatpush1.msra.mxu0 %v197
        %210 = vmatprep.subr.mxu0 %v200
        %211 = vmatpush1.msra.mxu0 %v199
        %212 = vmatprep.subr.mxu0 0.0
        %213 = vmatpush1.msra.mxu0 0.0
        %214 = vmatprep.subr.mxu0 0.0
        %215 = vmatpush1.msra.mxu0 0.0
        %216 = vmatprep.subr.mxu0 0.0
        %217 = vmatpush1.msra.mxu0 0.0
        %218 = vmatprep.subr.mxu0 0.0
        %219 = vmatpush1.msra.mxu0 0.0
        %220 = vmatprep.subr.mxu0 0.0
        %221 = vmatpush1.msra.mxu0 0.0
        %222 = vmatprep.subr.mxu0 0.0
        %223 = vmatpush1.msra.mxu0 0.0
        %224 = vmatprep.subr.mxu0 0.0
        %225 = vmatpush1.msra.mxu0 0.0
        %226 = vmatprep.subr.mxu0 0.0
        %227 = vmatpush1.msra.mxu0 0.0
        %228 = vmatprep.subr.mxu0 0.0
        %229 = vmatpush1.msra.mxu0 0.0
        %230 = vmatprep.subr.mxu0 0.0
        %231 = vmatpush1.msra.mxu0 0.0
        %232 = vmatprep.subr.mxu0 0.0
        %233 = vmatpush1.msra.mxu0 0.0
        %234 = vmatprep.subr.mxu0 0.0
        %235 = vmatpush1.msra.mxu0 0.0
        %236 = vmatprep.subr.mxu0 0.0
        %237 = vmatpush1.msra.mxu0 0.0
        %238 = vmatprep.subr.mxu0 0.0
        %239 = vmatpush1.msra.mxu0 0.0
        %240 = vmatprep.subr.mxu0 0.0
        %241 = vmatpush1.msra.mxu0 0.0
        %242 = vmatprep.subr.mxu0 0.0
        %243 = vmatpush1.msra.mxu0 0.0
        %244 = vmatprep.subr.mxu0 0.0
        %245 = vmatpush1.msra.mxu0 0.0
        %246 = vmatprep.subr.mxu0 0.0
        %247 = vmatpush1.msra.mxu0 0.0
        %248 = vmatprep.subr.mxu0 0.0
        %249 = vmatpush1.msra.mxu0 0.0
        %250 = vmatprep.subr.mxu0 0.0
        %251 = vmatpush1.msra.mxu0 0.0
        %252 = vmatprep.subr.mxu0 0.0
        %253 = vmatpush1.msra.mxu0 0.0
        %254 = vmatprep.subr.mxu0 0.0
        %255 = vmatpush1.msra.mxu0 0.0
        %256 = vmatprep.subr.mxu0 0.0
        %257 = vmatpush1.msra.mxu0 0.0
        %258 = vmatprep.subr.mxu0 0.0
        %259 = vmatpush1.msra.mxu0 0.0
        %260 = vmatprep.subr.mxu0 0.0
        %261 = vmatpush1.msra.mxu0 0.0
        %262 = vmatprep.subr.mxu0 0.0
        %263 = vmatpush1.msra.mxu0 0.0
        %264 = vmatprep.subr.mxu0 0.0
        %265 = vmatpush1.msra.mxu0 0.0
        %266 = vmatprep.subr.mxu0 0.0
        %267 = vmatpush1.msra.mxu0 0.0
        %268 = vmatprep.mubr.f32.mxu0 0.0
        %269 = vmatmul.mubr.f32.gmra.mrb[0].mxu0 %v202
        %v270 = vpop.f32.mrb[0].mxu0
        %v271 = vadd.f32 0.0, %v270
        %v272 = vpop.f32.mrb[0].mxu0
        %v273 = vadd.f32 0.0, %v272
        %274 = vdwg.mxu0
        %v275 = vmax.f32 %v271, 0.0
        %v276 = vmul.f32 %v273, 0.5
        %v277 = vtanh.pop %v276
        %v278 = vmul.f32 %v277, 0.5
        %v279 = vadd.f32 %v278, 0.5
        %v280 = vmul.f32 %v275, %v279
        %vm281 = vcmask 523264
        %282 = vst.msk [vmem:[%s162] sm:$0xff] %vm281, %v280
        %vm283 = vcmask 7168
        %284 = vst.msk [vmem:[%s176] sm:$0xff] %vm283, %v189
        %s285 = sand.u32 %s73, 1
        %s286 = scalar_lea.sflag [#allocation3], %s285
        %s287 = sand.u32 %s73, 1
        %s288 = smul.addr %s287, 8
        %s289 = scalar_lea.vmem [#allocation2], %s288
        %p290 = scmp.lt.s32.totalorder %s18, 1
        %s291 = scalar_select %p290, %s18, 1
        %s292 = smul.addr %s291, 8
        %s293 = scalar_lea.vmem %s3, %s292
        // Predicated region
        $region29: #{encoder_forward.1} parent=27 // pred_check
          %p294 = pneg %p83
        $region30: #{encoder_forward.1} parent=27 // pred_check_branch
          %296 = sbr.rel (%p294) target = $region32
        $region31: #{encoder_forward.1} parent=27 // pred_region
          %s298 = ssub.s32 128, 128
          %299 = vsyncadd %s286, %s298
          %s300 = smul.addr %s18, 128
          %s301 = scalar_lea.hbm %s2, %s300
          %s303 = sshll.u32 %s289, 4
          %s304 = int_to_ptr.vmem [resolvable:$true] %s303
          %306 = dma.vmem_to_hbm [thread:$0]  %s304, 128, %s301, %s286
        $region32: #{encoder_forward.1} parent=27 // pred_fallthru
          _
        // Predicated region
        $region33: #{encoder_forward.1} parent=27 // pred_check
          %p307 = pneg %p109
        $region34: #{encoder_forward.1} parent=27 // pred_check_branch
          %309 = sbr.rel (%p307) target = $region36
        $region35: #{encoder_forward.1} parent=27 // pred_region
          _
        $region36: #{encoder_forward.1} parent=27 // pred_fallthru
          _
      $region28: #{encoder_forward.1} parent=5 // pred_fallthru
        _
      %p310 = scmp.le.s32.totalorder 2, %s13
      // Predicated region
      $region37: #{encoder_forward.1} parent=5 // pred_check
        %p311 = pneg %p310
      $region38: #{encoder_forward.1} parent=5 // pred_check_branch
        %313 = sbr.rel (%p311) target = $region40
      $region39: #{encoder_forward.1} parent=5 // pred_region
        %s314 = ssub.s32 %s13, 2
        // Predicated region
        $region41: #{encoder_forward.1} parent=39 // pred_check
          %p315 = pneg %p89
        $region42: #{encoder_forward.1} parent=39 // pred_check_branch
          %317 = sbr.rel (%p315) target = $region44
        $region43: #{encoder_forward.1} parent=39 // pred_region
          %s318 = sand.u32 %s74, 1
          %s319 = scalar_lea.sflag [#allocation3], %s318
          %s320 = sand.u32 %s74, 1
          %s321 = smul.addr %s320, 8
          %s322 = scalar_lea.vmem [#allocation2], %s321
          %323 = dma.done %s319, 128
        $region44: #{encoder_forward.1} parent=39 // pred_fallthru
          _
        // Predicated region
        $region45: #{encoder_forward.1} parent=39 // pred_check
          %p324 = pneg %p115
        $region46: #{encoder_forward.1} parent=39 // pred_check_branch
          %326 = sbr.rel (%p324) target = $region48
        $region47: #{encoder_forward.1} parent=39 // pred_region
          %p327 = scmp.lt.s32.totalorder %s19, 1
          %s328 = scalar_select %p327, %s19, 1
          %s329 = smul.addr %s328, 8
          %s330 = scalar_lea.vmem %s3, %s329
        $region48: #{encoder_forward.1} parent=39 // pred_fallthru
          _
      $region40: #{encoder_forward.1} parent=5 // pred_fallthru
        _
    $region6: #{encoder_forward.1} parent=1 // loop_footer
      %s17 = sadd.s32 1, %s13
    $region7: #{encoder_forward.1} parent=1 // loop_footer_branch
      %12 = sbr.rel target = $region3
    $region8: #{encoder_forward.1} parent=1 // loop_exit
      _
    %331 = vsyncpa [#allocation3], 1
    %s332 = scalar_lea.sflag [#allocation3], 1
    %333 = vsyncpa %s332, 1

</llo_original>
